<compile_context>
chip_gen: v6e
topology: v6e:2x2x1
jax: 0.10.0
libtpu: 0.0.40
codegen_flags: <defaults>
</compile_context>

<pallas_src>
import math

import jax
import jax.numpy as jnp
from jax import lax
from jax.experimental import pallas as pl
from jax.experimental.pallas import tpu as pltpu


def _round_up(n, m):
    return ((n + m - 1) // m) * m


def linoss_im_kernel(x_ref, wb_ref, wc_ref, coef_ref, d_ref, out_ref,
                     state_ref, bu_ref, ys_ref):
    TL = x_ref.shape[0]
    n_grp = TL // 8

    # Reset the carried (z, y) state at the first L-tile.
    @pl.when(pl.program_id(0) == 0)
    def _init():
        state_ref[...] = jnp.zeros_like(state_ref)

    # Fused B projection, staged through VMEM:  bu[l] = [Bu_r(l) | Bu_i(l)].
    bu_ref[...] = jnp.dot(x_ref[...].astype(wb_ref.dtype), wb_ref[...],
                          preferred_element_type=jnp.float32)

    def shift8(v, d):
        # out[k] = v[k - d] for k >= d, zeros below (blocked sublane shift).
        return jnp.concatenate(
            [jnp.zeros((d, v.shape[1]), v.dtype), v[:8 - d, :]], axis=0)

    # Coefficient plane layout (all (8, 2P), real coeffs duplicated over the
    # [re | im] lane halves):
    #   0..3   : M^1 components (11, 12, 21, 22)  -- stride-1 scan step
    #   4..7   : M^2 components                   -- stride-2 scan step
    #   8..11  : M^4 components                   -- stride-4 scan step
    #   12..15 : row k = (M^{k+1}) components     -- carried-state propagation
    #   16, 17 : step*M11, step*M21               -- F1 / F2 input scaling
    def group(g, carry):
        z0, y0 = carry                                  # (1, 2P): [re | im]
        off = pl.multiple_of(g * 8, 8)
        bu = bu_ref[pl.ds(off, 8), :]                   # (8, 2P)

        bz = coef_ref[16] * bu                          # F1 = step*M11*Bu
        by = coef_ref[17] * bu                          # F2 = step*M21*Bu

        # 3-step blocked (Hillis-Steele) scan over the 8 sublanes / time steps.
        for si, d in enumerate((1, 2, 4)):
            sz = shift8(bz, d)
            sy = shift8(by, d)
            p11 = coef_ref[4 * si + 0]
            p12 = coef_ref[4 * si + 1]
            p21 = coef_ref[4 * si + 2]
            p22 = coef_ref[4 * si + 3]
            bz = p11 * sz + p12 * sy + bz
            by = p21 * sz + p22 * sy + by

        # Propagate the carried state across the group: s_k = M^{k+1} s0 + c_k.
        zb = coef_ref[12] * z0 + coef_ref[13] * y0 + bz
        yb = coef_ref[14] * z0 + coef_ref[15] * y0 + by

        # Retire y rows straight into the ys slab (lane/sublane dense store).
        ys_ref[pl.ds(off, 8), :] = yb
        return zb[7:8, :], yb[7:8, :]

    carry0 = (state_ref[0:1, :], state_ref[1:2, :])
    z_end, y_end = lax.fori_loop(0, n_grp, group, carry0,
                                 unroll=2 if n_grp >= 2 else 1)

    # Carry state to the next L-tile.
    state_ref[0:1, :] = z_end
    state_ref[1:2, :] = y_end

    # Fused C projection (real part) + D skip; single MXU dot, lane-dense store.
    out_ref[...] = (
        jnp.dot(ys_ref[...].astype(wc_ref.dtype), wc_ref[...],
                preferred_element_type=jnp.float32)
        + x_ref[...] * d_ref[...])


def linoss_layer_im(x, A_diag, B_real, B_img, C_real, C_img, D, steps,
                    *, block_l=128, use_bf16_matmul=False):
    """Pallas implementation of LinOSSLayer.forward with discretization='IM'.

    block_l ~ 128 is a good default (fills the 128-row MXU on v5e and keeps
    VMEM bounded on v7x); 256 can pay off on v6e/v7x for large H, P.
    """
    L, H = x.shape
    P = A_diag.shape[0]
    f32 = jnp.float32

    # --- cheap (P,)-sized parameter prep stays in plain JAX ---
    A = jax.nn.relu(A_diag.astype(f32))
    step = jax.nn.sigmoid(steps.astype(f32))
    schur = 1.0 / (1.0 + step ** 2 * A)
    M11 = 1.0 - step ** 2 * A * schur
    M12 = -step * A * schur
    M21 = step * schur
    M22 = schur
    sf1 = step * M11
    sf2 = step * M21

    # Per-mode powers M^1..M^8 of the 2x2 recurrence matrix (elementwise in P).
    powers = [(M11, M12, M21, M22)]
    for _ in range(7):
        a11, a12, a21, a22 = powers[-1]
        powers.append((M11 * a11 + M12 * a21,
                       M11 * a12 + M12 * a22,
                       M21 * a11 + M22 * a21,
                       M21 * a12 + M22 * a22))

    # --- lane-dense padding + L tiling (layout plumbing, all in the wrapper) ---
    Hp = _round_up(H, 128)
    Pp = _round_up(P, 128)
    TL = min(_round_up(L, 8), _round_up(max(block_l, 8), 8))
    Lp = _round_up(L, TL)

    x_pad = jnp.pad(x.astype(f32), ((0, Lp - L), (0, Hp - H)))

    def pad2(a, r, c):
        a = a.astype(f32)
        return jnp.pad(a, ((0, r - a.shape[0]), (0, c - a.shape[1])))

    Br = pad2(B_real, Pp, Hp)
    Bi = pad2(B_img, Pp, Hp)
    Cr = pad2(C_real, Hp, Pp)
    Ci = pad2(C_img, Hp, Pp)

    w_dtype = jnp.bfloat16 if use_bf16_matmul else f32
    W_B = jnp.concatenate([Br.T, Bi.T], axis=1).astype(w_dtype)   # (Hp, 2Pp)
    W_C = jnp.concatenate([Cr, -Ci], axis=1).T.astype(w_dtype)    # (2Pp, Hp)

    pad1 = lambda v: jnp.pad(v.astype(f32), (0, Pp - P))

    def dup(v):                       # (P,) -> (2Pp,), duplicated over [re|im]
        vp = pad1(v)
        return jnp.concatenate([vp, vp], axis=0)

    def plane_const(v):
        return jnp.broadcast_to(dup(v)[None, :], (8, 2 * Pp))

    def plane_rows(vs):
        return jnp.stack([dup(v) for v in vs], axis=0)            # (8, 2Pp)

    planes = []
    for d in (1, 2, 4):               # scan stride planes: M^d (row-constant)
        for comp in powers[d - 1]:
            planes.append(plane_const(comp))
    for ci in range(4):               # carried-state planes: row k = (M^{k+1})
        planes.append(plane_rows([powers[k][ci] for k in range(8)]))
    planes.append(plane_const(sf1))
    planes.append(plane_const(sf2))
    coef = jnp.stack(planes, axis=0)                              # (18, 8, 2Pp)

    D_row = jnp.pad(D.astype(f32), (0, Hp - H)).reshape(1, Hp)

    grid = (Lp // TL,)

    # --- explicit VMEM budget (v7x has 64 MiB physical; default scoped 32) ---
    w_bytes = 2 if use_bf16_matmul else 4
    vmem_need = (
        4 * (2 * TL * Hp)                      # x (double-buffered)
        + 4 * (2 * TL * Hp)                    # out (double-buffered)
        + w_bytes * (2 * Hp * 2 * Pp)          # W_B + W_C (resident, 1 copy)
        + 4 * (18 * 8 * 2 * Pp)                # coefficient planes
        + 4 * (8 * Hp)                         # D row (padded tile)
        + 4 * (8 * 2 * Pp)                     # carried state (padded tile)
        + 4 * (2 * TL * 2 * Pp)                # Bu + ys slabs
    )
    vmem_limit = int(min(max(int(vmem_need * 1.5) + (2 << 20), 32 << 20),
                         96 << 20))

    cost = pl.CostEstimate(
        flops=int(2 * Lp * Hp * (2 * Pp) * 2 + 70 * Lp * Pp),
        transcendentals=0,
        bytes_accessed=int(4 * (2 * Lp * Hp)
                           + w_bytes * (2 * Hp * 2 * Pp)
                           + 4 * (18 * 8 * 2 * Pp + Hp)),
    )

    out_pad = pl.pallas_call(
        linoss_im_kernel,
        out_shape=jax.ShapeDtypeStruct((Lp, Hp), jnp.float32),
        grid_spec=pltpu.PrefetchScalarGridSpec(
            num_scalar_prefetch=0,
            grid=grid,
            in_specs=[
                pl.BlockSpec((TL, Hp), lambda i: (i, 0)),            # x tile
                pl.BlockSpec(memory_space=pltpu.MemorySpace.VMEM),   # W_B
                pl.BlockSpec(memory_space=pltpu.MemorySpace.VMEM),   # W_C
                pl.BlockSpec(memory_space=pltpu.MemorySpace.VMEM),   # coeff planes
                pl.BlockSpec(memory_space=pltpu.MemorySpace.VMEM),   # D row
            ],
            out_specs=pl.BlockSpec((TL, Hp), lambda i: (i, 0)),
            scratch_shapes=[
                pltpu.VMEM((2, 2 * Pp), jnp.float32),     # carried (z, y) state
                pltpu.VMEM((TL, 2 * Pp), jnp.float32),    # Bu slab
                pltpu.VMEM((TL, 2 * Pp), jnp.float32),    # ys slab
            ],
        ),
        compiler_params=pltpu.CompilerParams(
            dimension_semantics=("arbitrary",),           # sequential L carry
            vmem_limit_bytes=vmem_limit),
        cost_estimate=cost,
    )(x_pad, W_B, W_C, coef, D_row)

    return out_pad[:L, :H]


def linoss_layer_im_reference(x, A_diag, B_real, B_img, C_real, C_img, D, steps):
    """Pure-JAX reference mirroring the PyTorch module (IM discretization)."""
    A = jax.nn.relu(A_diag)
    B = B_real + 1j * B_img
    C = C_real + 1j * C_img
    step = jax.nn.sigmoid(steps)
    Bu = x.astype(jnp.complex64) @ B.T
    schur = 1.0 / (1.0 + step ** 2 * A)
    M11 = 1.0 - step ** 2 * A * schur
    M12 = -step * A * schur
    M21 = step * schur
    M22 = schur
    F1 = step * M11 * Bu
    F2 = step * M21 * Bu
    P = A.shape[0]

    def scan_fn(carry, f):
        z, y = carry
        f1, f2 = f
        z_new = M11 * z + M12 * y + f1
        y_new = M21 * z + M22 * y + f2
        return (z_new, y_new), y_new

    init = (jnp.zeros((P,), jnp.complex64), jnp.zeros((P,), jnp.complex64))
    _, ys = lax.scan(scan_fn, init, (F1, F2))
    out = (ys @ C.T).real
    return out + x * D


def _make_params(key, L, H, P):
    ks = jax.random.split(key, 8)
    A_diag = jax.random.uniform(ks[0], (P,), jnp.float32)
    bstd = 1.0 / math.sqrt(H)
    B_real = jax.random.uniform(ks[1], (P, H), jnp.float32, -bstd, bstd)
    B_img = jax.random.uniform(ks[2], (P, H), jnp.float32, -bstd, bstd)
    cstd = 1.0 / math.sqrt(P)
    C_real = jax.random.uniform(ks[3], (H, P), jnp.float32, -cstd, cstd)
    C_img = jax.random.uniform(ks[4], (H, P), jnp.float32, -cstd, cstd)
    D = jax.random.uniform(ks[5], (H,), jnp.float32)
    steps = jax.random.uniform(ks[6], (P,), jnp.float32)
    x = jax.random.normal(ks[7], (L, H), jnp.float32)
    return x, A_diag, B_real, B_img, C_real, C_img, D, steps


if __name__ == "__main__":
    key = jax.random.PRNGKey(0)
    k1, k2 = jax.random.split(key)

    # Small shapes consistent with the module: seq L=16, hidden H=32, ssm P=32.
    args = _make_params(k1, L=16, H=32, P=32)
    ref = linoss_layer_im_reference(*args)

    # Single L-tile path (default block_l covers the whole sequence).
    out = jax.block_until_ready(linoss_layer_im(*args))
    assert out.shape == (16, 32)
    assert jnp.allclose(out, ref, atol=1e-4, rtol=1e-4), "mismatch (single tile)"

    # Multi-tile path: block_l=8 -> 2 grid steps, exercises the carried state.
    out_b = jax.block_until_ready(linoss_layer_im(*args, block_l=8))
    assert jnp.allclose(out_b, ref, atol=1e-4, rtol=1e-4), "mismatch (multi tile)"

    # Ragged shapes to exercise the lane/sublane/time padding paths.
    args2 = _make_params(k2, L=13, H=20, P=24)
    out2 = jax.block_until_ready(linoss_layer_im(*args2, block_l=8))
    ref2 = linoss_layer_im_reference(*args2)
    assert out2.shape == (13, 20)
    assert jnp.allclose(out2, ref2, atol=1e-4, rtol=1e-4), "mismatch (ragged)"

    print("KERNEL_OK")
</pallas_src>

<mosaic_0001>
module attributes {stable_mosaic.version = 11 : i64} {
  func.func @linoss_im_kernel(%arg0: i32, %arg1: memref<16x128xf32, #tpu.memory_space<vmem>>, %arg2: memref<128x256xf32, #tpu.memory_space<vmem>>, %arg3: memref<256x128xf32, #tpu.memory_space<vmem>>, %arg4: memref<18x8x256xf32, #tpu.memory_space<vmem>>, %arg5: memref<1x128xf32, #tpu.memory_space<vmem>>, %arg6: memref<16x128xf32, #tpu.memory_space<vmem>>, %arg7: memref<2x256xf32, #tpu.memory_space<vmem>>, %arg8: memref<16x256xf32, #tpu.memory_space<vmem>>, %arg9: memref<16x256xf32, #tpu.memory_space<vmem>>) attributes {dimension_semantics = [#tpu.dimension_semantics<arbitrary>], iteration_bounds = array<i64: 1>, scalar_prefetch = 0 : i64, scratch_operands = 3 : i64, tpu.core_type = #tpu.core_type<tc>, window_params = [{transform_indices = @transform_0, window_bounds = array<i64: 16, 128>}, {pipeline_mode = #tpu.pipeline_mode<synchronous>, transform_indices = @transform_1, window_bounds = array<i64: 128, 256>}, {pipeline_mode = #tpu.pipeline_mode<synchronous>, transform_indices = @transform_2, window_bounds = array<i64: 256, 128>}, {pipeline_mode = #tpu.pipeline_mode<synchronous>, transform_indices = @transform_3, window_bounds = array<i64: 18, 8, 256>}, {pipeline_mode = #tpu.pipeline_mode<synchronous>, transform_indices = @transform_4, window_bounds = array<i64: 1, 128>}, {transform_indices = @transform_5, window_bounds = array<i64: 16, 128>}]} {
    %c0_i32 = arith.constant 0 : i32
    %0 = arith.cmpi eq, %arg0, %c0_i32 : i32
    %1 = arith.extui %0 : i1 to i32
    %c0_i32_0 = arith.constant 0 : i32
    %2 = arith.cmpi ne, %1, %c0_i32_0 : i32
    scf.if %2 {
      %cst_134 = arith.constant 0.000000e+00 : f32
      %220 = vector.broadcast %cst_134 : f32 to vector<2x256xf32>
      %c0_135 = arith.constant 0 : index
      %c0_136 = arith.constant 0 : index
      %221 = vector.load %arg7[%c0_135, %c0_136] : memref<2x256xf32, #tpu.memory_space<vmem>>, vector<2x256xf32>
      tpu.vector_store %arg7[%c0_135, %c0_136], %220 {strides = array<i32>} : memref<2x256xf32, #tpu.memory_space<vmem>>, vector<2x256xf32>,
    } else {
    }
    %c0 = arith.constant 0 : index
    %c0_1 = arith.constant 0 : index
    %3 = vector.load %arg1[%c0, %c0_1] : memref<16x128xf32, #tpu.memory_space<vmem>>, vector<16x128xf32>
    %c0_2 = arith.constant 0 : index
    %c0_3 = arith.constant 0 : index
    %4 = vector.load %arg2[%c0_2, %c0_3] : memref<128x256xf32, #tpu.memory_space<vmem>>, vector<128x256xf32>
    %cst = arith.constant dense<0.000000e+00> : vector<16x256xf32>
    %5 = tpu.matmul %3, %4, %cst {dimension_numbers = #tpu.dot_dimension_numbers<[1], [0], [0], [1], [0, 0, 1, 1], [], []>} : vector<16x128xf32>, vector<128x256xf32>, vector<16x256xf32> -> vector<16x256xf32>
    %c0_4 = arith.constant 0 : index
    %c0_5 = arith.constant 0 : index
    %6 = vector.load %arg8[%c0_4, %c0_5] : memref<16x256xf32, #tpu.memory_space<vmem>>, vector<16x256xf32>
    tpu.vector_store %arg8[%c0_4, %c0_5], %5 {strides = array<i32>} : memref<16x256xf32, #tpu.memory_space<vmem>>, vector<16x256xf32>,
    %c0_6 = arith.constant 0 : index
    %c0_7 = arith.constant 0 : index
    %7 = vector.load %arg7[%c0_6, %c0_7] : memref<2x256xf32, #tpu.memory_space<vmem>>, vector<1x256xf32>
    %c1 = arith.constant 1 : index
    %c0_8 = arith.constant 0 : index
    %8 = vector.load %arg7[%c1, %c0_8] : memref<2x256xf32, #tpu.memory_space<vmem>>, vector<1x256xf32>
    %c0_i32_9 = arith.constant 0 : i32
    %c8_i32 = arith.constant 8 : i32
    %9 = arith.muli %c0_i32_9, %c8_i32 : i32
    %10 = tpu.assume_multiple %9, 8 : i32
    %11 = arith.index_cast %10 : i32 to index
    %c0_10 = arith.constant 0 : index
    %12 = vector.load %arg8[%11, %c0_10] : memref<16x256xf32, #tpu.memory_space<vmem>>, vector<8x256xf32>
    %c16 = arith.constant 16 : index
    %c0_11 = arith.constant 0 : index
    %c0_12 = arith.constant 0 : index
    %13 = vector.load %arg4[%c16, %c0_11, %c0_12] : memref<18x8x256xf32, #tpu.memory_space<vmem>>, vector<1x8x256xf32>
    %14 = vector.shape_cast %13 : vector<1x8x256xf32> to vector<8x256xf32>
    %15 = arith.mulf %14, %12 : vector<8x256xf32>
    %c17 = arith.constant 17 : index
    %c0_13 = arith.constant 0 : index
    %c0_14 = arith.constant 0 : index
    %16 = vector.load %arg4[%c17, %c0_13, %c0_14] : memref<18x8x256xf32, #tpu.memory_space<vmem>>, vector<1x8x256xf32>
    %17 = vector.shape_cast %16 : vector<1x8x256xf32> to vector<8x256xf32>
    %18 = arith.mulf %17, %12 : vector<8x256xf32>
    %cst_15 = arith.constant 0.000000e+00 : f32
    %19 = vector.broadcast %cst_15 : f32 to vector<1x256xf32>
    %20 = vector.extract_strided_slice %15 {offsets = [0, 0], sizes = [7, 256], strides = [1, 1]} : vector<8x256xf32> to vector<7x256xf32>
    %21 = tpu.concatenate %19, %20 in 0 : vector<1x256xf32>, vector<7x256xf32> -> vector<8x256xf32>
    %cst_16 = arith.constant 0.000000e+00 : f32
    %22 = vector.broadcast %cst_16 : f32 to vector<1x256xf32>
    %23 = vector.extract_strided_slice %18 {offsets = [0, 0], sizes = [7, 256], strides = [1, 1]} : vector<8x256xf32> to vector<7x256xf32>
    %24 = tpu.concatenate %22, %23 in 0 : vector<1x256xf32>, vector<7x256xf32> -> vector<8x256xf32>
    %c0_17 = arith.constant 0 : index
    %c0_18 = arith.constant 0 : index
    %c0_19 = arith.constant 0 : index
    %25 = vector.load %arg4[%c0_17, %c0_18, %c0_19] : memref<18x8x256xf32, #tpu.memory_space<vmem>>, vector<1x8x256xf32>
    %26 = vector.shape_cast %25 : vector<1x8x256xf32> to vector<8x256xf32>
    %c1_20 = arith.constant 1 : index
    %c0_21 = arith.constant 0 : index
    %c0_22 = arith.constant 0 : index
    %27 = vector.load %arg4[%c1_20, %c0_21, %c0_22] : memref<18x8x256xf32, #tpu.memory_space<vmem>>, vector<1x8x256xf32>
    %28 = vector.shape_cast %27 : vector<1x8x256xf32> to vector<8x256xf32>
    %c2 = arith.constant 2 : index
    %c0_23 = arith.constant 0 : index
    %c0_24 = arith.constant 0 : index
    %29 = vector.load %arg4[%c2, %c0_23, %c0_24] : memref<18x8x256xf32, #tpu.memory_space<vmem>>, vector<1x8x256xf32>
    %30 = vector.shape_cast %29 : vector<1x8x256xf32> to vector<8x256xf32>
    %c3 = arith.constant 3 : index
    %c0_25 = arith.constant 0 : index
    %c0_26 = arith.constant 0 : index
    %31 = vector.load %arg4[%c3, %c0_25, %c0_26] : memref<18x8x256xf32, #tpu.memory_space<vmem>>, vector<1x8x256xf32>
    %32 = vector.shape_cast %31 : vector<1x8x256xf32> to vector<8x256xf32>
    %33 = arith.mulf %26, %21 : vector<8x256xf32>
    %34 = arith.mulf %28, %24 : vector<8x256xf32>
    %35 = arith.addf %33, %34 : vector<8x256xf32>
    %36 = arith.addf %35, %15 : vector<8x256xf32>
    %37 = arith.mulf %30, %21 : vector<8x256xf32>
    %38 = arith.mulf %32, %24 : vector<8x256xf32>
    %39 = arith.addf %37, %38 : vector<8x256xf32>
    %40 = arith.addf %39, %18 : vector<8x256xf32>
    %cst_27 = arith.constant 0.000000e+00 : f32
    %41 = vector.broadcast %cst_27 : f32 to vector<2x256xf32>
    %42 = vector.extract_strided_slice %36 {offsets = [0, 0], sizes = [6, 256], strides = [1, 1]} : vector<8x256xf32> to vector<6x256xf32>
    %43 = tpu.concatenate %41, %42 in 0 : vector<2x256xf32>, vector<6x256xf32> -> vector<8x256xf32>
    %cst_28 = arith.constant 0.000000e+00 : f32
    %44 = vector.broadcast %cst_28 : f32 to vector<2x256xf32>
    %45 = vector.extract_strided_slice %40 {offsets = [0, 0], sizes = [6, 256], strides = [1, 1]} : vector<8x256xf32> to vector<6x256xf32>
    %46 = tpu.concatenate %44, %45 in 0 : vector<2x256xf32>, vector<6x256xf32> -> vector<8x256xf32>
    %c4 = arith.constant 4 : index
    %c0_29 = arith.constant 0 : index
    %c0_30 = arith.constant 0 : index
    %47 = vector.load %arg4[%c4, %c0_29, %c0_30] : memref<18x8x256xf32, #tpu.memory_space<vmem>>, vector<1x8x256xf32>
    %48 = vector.shape_cast %47 : vector<1x8x256xf32> to vector<8x256xf32>
    %c5 = arith.constant 5 : index
    %c0_31 = arith.constant 0 : index
    %c0_32 = arith.constant 0 : index
    %49 = vector.load %arg4[%c5, %c0_31, %c0_32] : memref<18x8x256xf32, #tpu.memory_space<vmem>>, vector<1x8x256xf32>
    %50 = vector.shape_cast %49 : vector<1x8x256xf32> to vector<8x256xf32>
    %c6 = arith.constant 6 : index
    %c0_33 = arith.constant 0 : index
    %c0_34 = arith.constant 0 : index
    %51 = vector.load %arg4[%c6, %c0_33, %c0_34] : memref<18x8x256xf32, #tpu.memory_space<vmem>>, vector<1x8x256xf32>
    %52 = vector.shape_cast %51 : vector<1x8x256xf32> to vector<8x256xf32>
    %c7 = arith.constant 7 : index
    %c0_35 = arith.constant 0 : index
    %c0_36 = arith.constant 0 : index
    %53 = vector.load %arg4[%c7, %c0_35, %c0_36] : memref<18x8x256xf32, #tpu.memory_space<vmem>>, vector<1x8x256xf32>
    %54 = vector.shape_cast %53 : vector<1x8x256xf32> to vector<8x256xf32>
    %55 = arith.mulf %48, %43 : vector<8x256xf32>
    %56 = arith.mulf %50, %46 : vector<8x256xf32>
    %57 = arith.addf %55, %56 : vector<8x256xf32>
    %58 = arith.addf %57, %36 : vector<8x256xf32>
    %59 = arith.mulf %52, %43 : vector<8x256xf32>
    %60 = arith.mulf %54, %46 : vector<8x256xf32>
    %61 = arith.addf %59, %60 : vector<8x256xf32>
    %62 = arith.addf %61, %40 : vector<8x256xf32>
    %cst_37 = arith.constant 0.000000e+00 : f32
    %63 = vector.broadcast %cst_37 : f32 to vector<4x256xf32>
    %64 = vector.extract_strided_slice %58 {offsets = [0, 0], sizes = [4, 256], strides = [1, 1]} : vector<8x256xf32> to vector<4x256xf32>
    %65 = tpu.concatenate %63, %64 in 0 : vector<4x256xf32>, vector<4x256xf32> -> vector<8x256xf32>
    %cst_38 = arith.constant 0.000000e+00 : f32
    %66 = vector.broadcast %cst_38 : f32 to vector<4x256xf32>
    %67 = vector.extract_strided_slice %62 {offsets = [0, 0], sizes = [4, 256], strides = [1, 1]} : vector<8x256xf32> to vector<4x256xf32>
    %68 = tpu.concatenate %66, %67 in 0 : vector<4x256xf32>, vector<4x256xf32> -> vector<8x256xf32>
    %c8 = arith.constant 8 : index
    %c0_39 = arith.constant 0 : index
    %c0_40 = arith.constant 0 : index
    %69 = vector.load %arg4[%c8, %c0_39, %c0_40] : memref<18x8x256xf32, #tpu.memory_space<vmem>>, vector<1x8x256xf32>
    %70 = vector.shape_cast %69 : vector<1x8x256xf32> to vector<8x256xf32>
    %c9 = arith.constant 9 : index
    %c0_41 = arith.constant 0 : index
    %c0_42 = arith.constant 0 : index
    %71 = vector.load %arg4[%c9, %c0_41, %c0_42] : memref<18x8x256xf32, #tpu.memory_space<vmem>>, vector<1x8x256xf32>
    %72 = vector.shape_cast %71 : vector<1x8x256xf32> to vector<8x256xf32>
    %c10 = arith.constant 10 : index
    %c0_43 = arith.constant 0 : index
    %c0_44 = arith.constant 0 : index
    %73 = vector.load %arg4[%c10, %c0_43, %c0_44] : memref<18x8x256xf32, #tpu.memory_space<vmem>>, vector<1x8x256xf32>
    %74 = vector.shape_cast %73 : vector<1x8x256xf32> to vector<8x256xf32>
    %c11 = arith.constant 11 : index
    %c0_45 = arith.constant 0 : index
    %c0_46 = arith.constant 0 : index
    %75 = vector.load %arg4[%c11, %c0_45, %c0_46] : memref<18x8x256xf32, #tpu.memory_space<vmem>>, vector<1x8x256xf32>
    %76 = vector.shape_cast %75 : vector<1x8x256xf32> to vector<8x256xf32>
    %77 = arith.mulf %70, %65 : vector<8x256xf32>
    %78 = arith.mulf %72, %68 : vector<8x256xf32>
    %79 = arith.addf %77, %78 : vector<8x256xf32>
    %80 = arith.addf %79, %58 : vector<8x256xf32>
    %81 = arith.mulf %74, %65 : vector<8x256xf32>
    %82 = arith.mulf %76, %68 : vector<8x256xf32>
    %83 = arith.addf %81, %82 : vector<8x256xf32>
    %84 = arith.addf %83, %62 : vector<8x256xf32>
    %c12 = arith.constant 12 : index
    %c0_47 = arith.constant 0 : index
    %c0_48 = arith.constant 0 : index
    %85 = vector.load %arg4[%c12, %c0_47, %c0_48] : memref<18x8x256xf32, #tpu.memory_space<vmem>>, vector<1x8x256xf32>
    %86 = vector.shape_cast %85 : vector<1x8x256xf32> to vector<8x256xf32>
    %87 = vector.broadcast %7 : vector<1x256xf32> to vector<8x256xf32>
    %88 = arith.mulf %86, %87 : vector<8x256xf32>
    %c13 = arith.constant 13 : index
    %c0_49 = arith.constant 0 : index
    %c0_50 = arith.constant 0 : index
    %89 = vector.load %arg4[%c13, %c0_49, %c0_50] : memref<18x8x256xf32, #tpu.memory_space<vmem>>, vector<1x8x256xf32>
    %90 = vector.shape_cast %89 : vector<1x8x256xf32> to vector<8x256xf32>
    %91 = vector.broadcast %8 : vector<1x256xf32> to vector<8x256xf32>
    %92 = arith.mulf %90, %91 : vector<8x256xf32>
    %93 = arith.addf %88, %92 : vector<8x256xf32>
    %94 = arith.addf %93, %80 : vector<8x256xf32>
    %c14 = arith.constant 14 : index
    %c0_51 = arith.constant 0 : index
    %c0_52 = arith.constant 0 : index
    %95 = vector.load %arg4[%c14, %c0_51, %c0_52] : memref<18x8x256xf32, #tpu.memory_space<vmem>>, vector<1x8x256xf32>
    %96 = vector.shape_cast %95 : vector<1x8x256xf32> to vector<8x256xf32>
    %97 = vector.broadcast %7 : vector<1x256xf32> to vector<8x256xf32>
    %98 = arith.mulf %96, %97 : vector<8x256xf32>
    %c15 = arith.constant 15 : index
    %c0_53 = arith.constant 0 : index
    %c0_54 = arith.constant 0 : index
    %99 = vector.load %arg4[%c15, %c0_53, %c0_54] : memref<18x8x256xf32, #tpu.memory_space<vmem>>, vector<1x8x256xf32>
    %100 = vector.shape_cast %99 : vector<1x8x256xf32> to vector<8x256xf32>
    %101 = vector.broadcast %8 : vector<1x256xf32> to vector<8x256xf32>
    %102 = arith.mulf %100, %101 : vector<8x256xf32>
    %103 = arith.addf %98, %102 : vector<8x256xf32>
    %104 = arith.addf %103, %84 : vector<8x256xf32>
    %105 = arith.index_cast %10 : i32 to index
    %c0_55 = arith.constant 0 : index
    %106 = vector.load %arg9[%105, %c0_55] : memref<16x256xf32, #tpu.memory_space<vmem>>, vector<8x256xf32>
    tpu.vector_store %arg9[%105, %c0_55], %104 {strides = array<i32>} : memref<16x256xf32, #tpu.memory_space<vmem>>, vector<8x256xf32>,
    %107 = vector.extract_strided_slice %94 {offsets = [7, 0], sizes = [1, 256], strides = [1, 1]} : vector<8x256xf32> to vector<1x256xf32>
    %108 = vector.extract_strided_slice %104 {offsets = [7, 0], sizes = [1, 256], strides = [1, 1]} : vector<8x256xf32> to vector<1x256xf32>
    %c1_i32 = arith.constant 1 : i32
    %c8_i32_56 = arith.constant 8 : i32
    %109 = arith.muli %c1_i32, %c8_i32_56 : i32
    %110 = tpu.assume_multiple %109, 8 : i32
    %111 = arith.index_cast %110 : i32 to index
    %c0_57 = arith.constant 0 : index
    %112 = vector.load %arg8[%111, %c0_57] : memref<16x256xf32, #tpu.memory_space<vmem>>, vector<8x256xf32>
    %c16_58 = arith.constant 16 : index
    %c0_59 = arith.constant 0 : index
    %c0_60 = arith.constant 0 : index
    %113 = vector.load %arg4[%c16_58, %c0_59, %c0_60] : memref<18x8x256xf32, #tpu.memory_space<vmem>>, vector<1x8x256xf32>
    %114 = vector.shape_cast %113 : vector<1x8x256xf32> to vector<8x256xf32>
    %115 = arith.mulf %114, %112 : vector<8x256xf32>
    %c17_61 = arith.constant 17 : index
    %c0_62 = arith.constant 0 : index
    %c0_63 = arith.constant 0 : index
    %116 = vector.load %arg4[%c17_61, %c0_62, %c0_63] : memref<18x8x256xf32, #tpu.memory_space<vmem>>, vector<1x8x256xf32>
    %117 = vector.shape_cast %116 : vector<1x8x256xf32> to vector<8x256xf32>
    %118 = arith.mulf %117, %112 : vector<8x256xf32>
    %cst_64 = arith.constant 0.000000e+00 : f32
    %119 = vector.broadcast %cst_64 : f32 to vector<1x256xf32>
    %120 = vector.extract_strided_slice %115 {offsets = [0, 0], sizes = [7, 256], strides = [1, 1]} : vector<8x256xf32> to vector<7x256xf32>
    %121 = tpu.concatenate %119, %120 in 0 : vector<1x256xf32>, vector<7x256xf32> -> vector<8x256xf32>
    %cst_65 = arith.constant 0.000000e+00 : f32
    %122 = vector.broadcast %cst_65 : f32 to vector<1x256xf32>
    %123 = vector.extract_strided_slice %118 {offsets = [0, 0], sizes = [7, 256], strides = [1, 1]} : vector<8x256xf32> to vector<7x256xf32>
    %124 = tpu.concatenate %122, %123 in 0 : vector<1x256xf32>, vector<7x256xf32> -> vector<8x256xf32>
    %c0_66 = arith.constant 0 : index
    %c0_67 = arith.constant 0 : index
    %c0_68 = arith.constant 0 : index
    %125 = vector.load %arg4[%c0_66, %c0_67, %c0_68] : memref<18x8x256xf32, #tpu.memory_space<vmem>>, vector<1x8x256xf32>
    %126 = vector.shape_cast %125 : vector<1x8x256xf32> to vector<8x256xf32>
    %c1_69 = arith.constant 1 : index
    %c0_70 = arith.constant 0 : index
    %c0_71 = arith.constant 0 : index
    %127 = vector.load %arg4[%c1_69, %c0_70, %c0_71] : memref<18x8x256xf32, #tpu.memory_space<vmem>>, vector<1x8x256xf32>
    %128 = vector.shape_cast %127 : vector<1x8x256xf32> to vector<8x256xf32>
    %c2_72 = arith.constant 2 : index
    %c0_73 = arith.constant 0 : index
    %c0_74 = arith.constant 0 : index
    %129 = vector.load %arg4[%c2_72, %c0_73, %c0_74] : memref<18x8x256xf32, #tpu.memory_space<vmem>>, vector<1x8x256xf32>
    %130 = vector.shape_cast %129 : vector<1x8x256xf32> to vector<8x256xf32>
    %c3_75 = arith.constant 3 : index
    %c0_76 = arith.constant 0 : index
    %c0_77 = arith.constant 0 : index
    %131 = vector.load %arg4[%c3_75, %c0_76, %c0_77] : memref<18x8x256xf32, #tpu.memory_space<vmem>>, vector<1x8x256xf32>
    %132 = vector.shape_cast %131 : vector<1x8x256xf32> to vector<8x256xf32>
    %133 = arith.mulf %126, %121 : vector<8x256xf32>
    %134 = arith.mulf %128, %124 : vector<8x256xf32>
    %135 = arith.addf %133, %134 : vector<8x256xf32>
    %136 = arith.addf %135, %115 : vector<8x256xf32>
    %137 = arith.mulf %130, %121 : vector<8x256xf32>
    %138 = arith.mulf %132, %124 : vector<8x256xf32>
    %139 = arith.addf %137, %138 : vector<8x256xf32>
    %140 = arith.addf %139, %118 : vector<8x256xf32>
    %cst_78 = arith.constant 0.000000e+00 : f32
    %141 = vector.broadcast %cst_78 : f32 to vector<2x256xf32>
    %142 = vector.extract_strided_slice %136 {offsets = [0, 0], sizes = [6, 256], strides = [1, 1]} : vector<8x256xf32> to vector<6x256xf32>
    %143 = tpu.concatenate %141, %142 in 0 : vector<2x256xf32>, vector<6x256xf32> -> vector<8x256xf32>
    %cst_79 = arith.constant 0.000000e+00 : f32
    %144 = vector.broadcast %cst_79 : f32 to vector<2x256xf32>
    %145 = vector.extract_strided_slice %140 {offsets = [0, 0], sizes = [6, 256], strides = [1, 1]} : vector<8x256xf32> to vector<6x256xf32>
    %146 = tpu.concatenate %144, %145 in 0 : vector<2x256xf32>, vector<6x256xf32> -> vector<8x256xf32>
    %c4_80 = arith.constant 4 : index
    %c0_81 = arith.constant 0 : index
    %c0_82 = arith.constant 0 : index
    %147 = vector.load %arg4[%c4_80, %c0_81, %c0_82] : memref<18x8x256xf32, #tpu.memory_space<vmem>>, vector<1x8x256xf32>
    %148 = vector.shape_cast %147 : vector<1x8x256xf32> to vector<8x256xf32>
    %c5_83 = arith.constant 5 : index
    %c0_84 = arith.constant 0 : index
    %c0_85 = arith.constant 0 : index
    %149 = vector.load %arg4[%c5_83, %c0_84, %c0_85] : memref<18x8x256xf32, #tpu.memory_space<vmem>>, vector<1x8x256xf32>
    %150 = vector.shape_cast %149 : vector<1x8x256xf32> to vector<8x256xf32>
    %c6_86 = arith.constant 6 : index
    %c0_87 = arith.constant 0 : index
    %c0_88 = arith.constant 0 : index
    %151 = vector.load %arg4[%c6_86, %c0_87, %c0_88] : memref<18x8x256xf32, #tpu.memory_space<vmem>>, vector<1x8x256xf32>
    %152 = vector.shape_cast %151 : vector<1x8x256xf32> to vector<8x256xf32>
    %c7_89 = arith.constant 7 : index
    %c0_90 = arith.constant 0 : index
    %c0_91 = arith.constant 0 : index
    %153 = vector.load %arg4[%c7_89, %c0_90, %c0_91] : memref<18x8x256xf32, #tpu.memory_space<vmem>>, vector<1x8x256xf32>
    %154 = vector.shape_cast %153 : vector<1x8x256xf32> to vector<8x256xf32>
    %155 = arith.mulf %148, %143 : vector<8x256xf32>
    %156 = arith.mulf %150, %146 : vector<8x256xf32>
    %157 = arith.addf %155, %156 : vector<8x256xf32>
    %158 = arith.addf %157, %136 : vector<8x256xf32>
    %159 = arith.mulf %152, %143 : vector<8x256xf32>
    %160 = arith.mulf %154, %146 : vector<8x256xf32>
    %161 = arith.addf %159, %160 : vector<8x256xf32>
    %162 = arith.addf %161, %140 : vector<8x256xf32>
    %cst_92 = arith.constant 0.000000e+00 : f32
    %163 = vector.broadcast %cst_92 : f32 to vector<4x256xf32>
    %164 = vector.extract_strided_slice %158 {offsets = [0, 0], sizes = [4, 256], strides = [1, 1]} : vector<8x256xf32> to vector<4x256xf32>
    %165 = tpu.concatenate %163, %164 in 0 : vector<4x256xf32>, vector<4x256xf32> -> vector<8x256xf32>
    %cst_93 = arith.constant 0.000000e+00 : f32
    %166 = vector.broadcast %cst_93 : f32 to vector<4x256xf32>
    %167 = vector.extract_strided_slice %162 {offsets = [0, 0], sizes = [4, 256], strides = [1, 1]} : vector<8x256xf32> to vector<4x256xf32>
    %168 = tpu.concatenate %166, %167 in 0 : vector<4x256xf32>, vector<4x256xf32> -> vector<8x256xf32>
    %c8_94 = arith.constant 8 : index
    %c0_95 = arith.constant 0 : index
    %c0_96 = arith.constant 0 : index
    %169 = vector.load %arg4[%c8_94, %c0_95, %c0_96] : memref<18x8x256xf32, #tpu.memory_space<vmem>>, vector<1x8x256xf32>
    %170 = vector.shape_cast %169 : vector<1x8x256xf32> to vector<8x256xf32>
    %c9_97 = arith.constant 9 : index
    %c0_98 = arith.constant 0 : index
    %c0_99 = arith.constant 0 : index
    %171 = vector.load %arg4[%c9_97, %c0_98, %c0_99] : memref<18x8x256xf32, #tpu.memory_space<vmem>>, vector<1x8x256xf32>
    %172 = vector.shape_cast %171 : vector<1x8x256xf32> to vector<8x256xf32>
    %c10_100 = arith.constant 10 : index
    %c0_101 = arith.constant 0 : index
    %c0_102 = arith.constant 0 : index
    %173 = vector.load %arg4[%c10_100, %c0_101, %c0_102] : memref<18x8x256xf32, #tpu.memory_space<vmem>>, vector<1x8x256xf32>
    %174 = vector.shape_cast %173 : vector<1x8x256xf32> to vector<8x256xf32>
    %c11_103 = arith.constant 11 : index
    %c0_104 = arith.constant 0 : index
    %c0_105 = arith.constant 0 : index
    %175 = vector.load %arg4[%c11_103, %c0_104, %c0_105] : memref<18x8x256xf32, #tpu.memory_space<vmem>>, vector<1x8x256xf32>
    %176 = vector.shape_cast %175 : vector<1x8x256xf32> to vector<8x256xf32>
    %177 = arith.mulf %170, %165 : vector<8x256xf32>
    %178 = arith.mulf %172, %168 : vector<8x256xf32>
    %179 = arith.addf %177, %178 : vector<8x256xf32>
    %180 = arith.addf %179, %158 : vector<8x256xf32>
    %181 = arith.mulf %174, %165 : vector<8x256xf32>
    %182 = arith.mulf %176, %168 : vector<8x256xf32>
    %183 = arith.addf %181, %182 : vector<8x256xf32>
    %184 = arith.addf %183, %162 : vector<8x256xf32>
    %c12_106 = arith.constant 12 : index
    %c0_107 = arith.constant 0 : index
    %c0_108 = arith.constant 0 : index
    %185 = vector.load %arg4[%c12_106, %c0_107, %c0_108] : memref<18x8x256xf32, #tpu.memory_space<vmem>>, vector<1x8x256xf32>
    %186 = vector.shape_cast %185 : vector<1x8x256xf32> to vector<8x256xf32>
    %187 = vector.broadcast %107 : vector<1x256xf32> to vector<8x256xf32>
    %188 = arith.mulf %186, %187 : vector<8x256xf32>
    %c13_109 = arith.constant 13 : index
    %c0_110 = arith.constant 0 : index
    %c0_111 = arith.constant 0 : index
    %189 = vector.load %arg4[%c13_109, %c0_110, %c0_111] : memref<18x8x256xf32, #tpu.memory_space<vmem>>, vector<1x8x256xf32>
    %190 = vector.shape_cast %189 : vector<1x8x256xf32> to vector<8x256xf32>
    %191 = vector.broadcast %108 : vector<1x256xf32> to vector<8x256xf32>
    %192 = arith.mulf %190, %191 : vector<8x256xf32>
    %193 = arith.addf %188, %192 : vector<8x256xf32>
    %194 = arith.addf %193, %180 : vector<8x256xf32>
    %c14_112 = arith.constant 14 : index
    %c0_113 = arith.constant 0 : index
    %c0_114 = arith.constant 0 : index
    %195 = vector.load %arg4[%c14_112, %c0_113, %c0_114] : memref<18x8x256xf32, #tpu.memory_space<vmem>>, vector<1x8x256xf32>
    %196 = vector.shape_cast %195 : vector<1x8x256xf32> to vector<8x256xf32>
    %197 = vector.broadcast %107 : vector<1x256xf32> to vector<8x256xf32>
    %198 = arith.mulf %196, %197 : vector<8x256xf32>
    %c15_115 = arith.constant 15 : index
    %c0_116 = arith.constant 0 : index
    %c0_117 = arith.constant 0 : index
    %199 = vector.load %arg4[%c15_115, %c0_116, %c0_117] : memref<18x8x256xf32, #tpu.memory_space<vmem>>, vector<1x8x256xf32>
    %200 = vector.shape_cast %199 : vector<1x8x256xf32> to vector<8x256xf32>
    %201 = vector.broadcast %108 : vector<1x256xf32> to vector<8x256xf32>
    %202 = arith.mulf %200, %201 : vector<8x256xf32>
    %203 = arith.addf %198, %202 : vector<8x256xf32>
    %204 = arith.addf %203, %184 : vector<8x256xf32>
    %205 = arith.index_cast %110 : i32 to index
    %c0_118 = arith.constant 0 : index
    %206 = vector.load %arg9[%205, %c0_118] : memref<16x256xf32, #tpu.memory_space<vmem>>, vector<8x256xf32>
    tpu.vector_store %arg9[%205, %c0_118], %204 {strides = array<i32>} : memref<16x256xf32, #tpu.memory_space<vmem>>, vector<8x256xf32>,
    %207 = vector.extract_strided_slice %194 {offsets = [7, 0], sizes = [1, 256], strides = [1, 1]} : vector<8x256xf32> to vector<1x256xf32>
    %208 = vector.extract_strided_slice %204 {offsets = [7, 0], sizes = [1, 256], strides = [1, 1]} : vector<8x256xf32> to vector<1x256xf32>
    %c2_i32 = arith.constant 2 : i32
    %c0_119 = arith.constant 0 : index
    %c0_120 = arith.constant 0 : index
    %209 = vector.load %arg7[%c0_119, %c0_120] : memref<2x256xf32, #tpu.memory_space<vmem>>, vector<1x256xf32>
    tpu.vector_store %arg7[%c0_119, %c0_120], %207 {strides = array<i32>} : memref<2x256xf32, #tpu.memory_space<vmem>>, vector<1x256xf32>,
    %c1_121 = arith.constant 1 : index
    %c0_122 = arith.constant 0 : index
    %210 = vector.load %arg7[%c1_121, %c0_122] : memref<2x256xf32, #tpu.memory_space<vmem>>, vector<1x256xf32>
    tpu.vector_store %arg7[%c1_121, %c0_122], %208 {strides = array<i32>} : memref<2x256xf32, #tpu.memory_space<vmem>>, vector<1x256xf32>,
    %c0_123 = arith.constant 0 : index
    %c0_124 = arith.constant 0 : index
    %211 = vector.load %arg9[%c0_123, %c0_124] : memref<16x256xf32, #tpu.memory_space<vmem>>, vector<16x256xf32>
    %c0_125 = arith.constant 0 : index
    %c0_126 = arith.constant 0 : index
    %212 = vector.load %arg3[%c0_125, %c0_126] : memref<256x128xf32, #tpu.memory_space<vmem>>, vector<256x128xf32>
    %cst_127 = arith.constant dense<0.000000e+00> : vector<16x128xf32>
    %213 = tpu.matmul %211, %212, %cst_127 {dimension_numbers = #tpu.dot_dimension_numbers<[1], [0], [0], [1], [0, 0, 1, 1], [], []>} : vector<16x256xf32>, vector<256x128xf32>, vector<16x128xf32> -> vector<16x128xf32>
    %c0_128 = arith.constant 0 : index
    %c0_129 = arith.constant 0 : index
    %214 = vector.load %arg1[%c0_128, %c0_129] : memref<16x128xf32, #tpu.memory_space<vmem>>, vector<16x128xf32>
    %c0_130 = arith.constant 0 : index
    %c0_131 = arith.constant 0 : index
    %215 = vector.load %arg5[%c0_130, %c0_131] : memref<1x128xf32, #tpu.memory_space<vmem>>, vector<1x128xf32>
    %216 = vector.broadcast %215 : vector<1x128xf32> to vector<16x128xf32>
    %217 = arith.mulf %214, %216 : vector<16x128xf32>
    %218 = arith.addf %213, %217 : vector<16x128xf32>
    %c0_132 = arith.constant 0 : index
    %c0_133 = arith.constant 0 : index
    %219 = vector.load %arg6[%c0_132, %c0_133] : memref<16x128xf32, #tpu.memory_space<vmem>>, vector<16x128xf32>
    tpu.vector_store %arg6[%c0_132, %c0_133], %218 {strides = array<i32>} : memref<16x128xf32, #tpu.memory_space<vmem>>, vector<16x128xf32>,
    return
  }
  func.func @transform_0(%arg0: i32) -> (i32, i32) {
    %c0_i32 = arith.constant 0 : i32
    %c0_i32_0 = arith.constant 0 : i32
    return %arg0, %c0_i32 : i32, i32
  }
  func.func @transform_1(%arg0: i32) -> (i32, i32) {
    %c0_i32 = arith.constant 0 : i32
    %c0_i32_0 = arith.constant 0 : i32
    %c0_i32_1 = arith.constant 0 : i32
    return %c0_i32, %c0_i32_0 : i32, i32
  }
  func.func @transform_2(%arg0: i32) -> (i32, i32) {
    %c0_i32 = arith.constant 0 : i32
    %c0_i32_0 = arith.constant 0 : i32
    %c0_i32_1 = arith.constant 0 : i32
    return %c0_i32, %c0_i32_0 : i32, i32
  }
  func.func @transform_3(%arg0: i32) -> (i32, i32, i32) {
    %c0_i32 = arith.constant 0 : i32
    %c0_i32_0 = arith.constant 0 : i32
    %c0_i32_1 = arith.constant 0 : i32
    %c0_i32_2 = arith.constant 0 : i32
    return %c0_i32, %c0_i32_0, %c0_i32_1 : i32, i32, i32
  }
  func.func @transform_4(%arg0: i32) -> (i32, i32) {
    %c0_i32 = arith.constant 0 : i32
    %c0_i32_0 = arith.constant 0 : i32
    %c0_i32_1 = arith.constant 0 : i32
    return %c0_i32, %c0_i32_0 : i32, i32
  }
  func.func @transform_5(%arg0: i32) -> (i32, i32) {
    %c0_i32 = arith.constant 0 : i32
    %c0_i32_0 = arith.constant 0 : i32
    return %arg0, %c0_i32 : i32, i32
  }
}

</mosaic_0001>

<llo_original>
// kernel: tpu_custom_call.1
$region0: #{tpu_custom_call.1}
  #allocation0 [shape = 'u32[]', space=smem, size = 0x4, offset = 0x4, fixed_abs, tag = 'smem constant byte address 0x4 - core index']
  #allocation1 [shape = 'u32[144,128]{1,0:T(1,128)}', space=vmem, size = 0x12000, scoped, tag = 'internal scratch']
  #allocation2 [shape = 'f32[2,256]{1,0:T(2,128)}', space=vmem, size = 0x800, scoped, tag = 'scratch operand']
  #allocation3 [shape = 'f32[16,256]{1,0:T(8,128)}', space=vmem, size = 0x4000, scoped, tag = 'scratch operand']
  #allocation4 [shape = 'f32[16,256]{1,0:T(8,128)}', space=vmem, size = 0x4000, scoped, tag = 'scratch operand']
  %s0 = inlined_call_operand.hbm [shape: f32[16,128], index: 0, kind: input, shape index: {}]
  %s1 = inlined_call_operand.hbm [shape: f32[128,256], index: 1, kind: input, shape index: {}]
  %s2 = inlined_call_operand.hbm [shape: f32[256,128], index: 2, kind: input, shape index: {}]
  %s3 = inlined_call_operand.hbm [shape: f32[18,8,256], index: 3, kind: input, shape index: {}]
  %s4 = inlined_call_operand.vmem [shape: f32[1,128], index: 4, kind: input, shape index: {}]
  %s5 = inlined_call_operand.hbm [shape: f32[16,128], index: 5, kind: output, shape index: {}]
  %s6 = sld [smem:[#allocation0]]
  $region50: #{tpu_custom_call.1} parent=0
    _
  %s8 = ssub.s32 1, %s6
  %s9 = scalar_select 0, %s8, %s6
  $region1: #{tpu_custom_call.1} parent=0
    #allocation5 [shape = 'u8[8192]{0}', space=vmem, size = 0x2000, scoped, tag = 'input window, operand 0, single buffered']
    #allocation6 [shape = 's32[1]{0}', space=sflag, size = 0x4, scoped, tag = 'scoped memory for tpu_custom_call.1']
    #allocation7 [shape = 's32[1]{0}', space=sflag, size = 0x4, scoped, tag = 'scoped memory for tpu_custom_call.1']
    #allocation8 [shape = 'u8[131072]{0}', space=vmem, size = 0x20000, scoped, tag = 'input window, operand 1, single buffered']
    #allocation9 [shape = 's32[1]{0}', space=sflag, size = 0x4, scoped, tag = 'scoped memory for tpu_custom_call.1']
    #allocation10 [shape = 'u8[131072]{0}', space=vmem, size = 0x20000, scoped, tag = 'input window, operand 2, single buffered']
    #allocation11 [shape = 'u8[147456]{0}', space=vmem, size = 0x24000, scoped, tag = 'input window, operand 3, single buffered']
    #allocation12 [shape = 's32[1]{0}', space=sflag, size = 0x4, scoped, tag = 'scoped memory for tpu_custom_call.1']
    #allocation13 [shape = 'u8[8192]{0}', space=vmem, size = 0x2000, scoped, tag = 'output window, operand 0, single buffered']
    %10 = vsyncpa [#allocation6], 0
    %11 = vsyncpa [#allocation9], 0
    %12 = vsyncpa [#allocation12], 0
    %13 = vsyncpa [#allocation7], 0
    // Predicated region
    $region2: #{tpu_custom_call.1} parent=1 // pred_check
      _
    $region3: #{tpu_custom_call.1} parent=1 // pred_check_branch
      %15 = sbr.rel (0) target = $region5
    $region4: #{tpu_custom_call.1} parent=1 // pred_region
      %s17 = ssub.s32 256, 256
      %18 = vsyncadd [#allocation6], %s17
      %s19 = sshll.u32 [#allocation5], 4
      %s20 = int_to_ptr.vmem [resolvable:$true] %s19
      %25 = dma.hbm_to_vmem [thread:$0]  %s0, 256, %s20, [#allocation6], 128, 128, 8
    $region5: #{tpu_custom_call.1} parent=1 // pred_fallthru
      _
    // Predicated region
    $region6: #{tpu_custom_call.1} parent=1 // pred_check
      _
    $region7: #{tpu_custom_call.1} parent=1 // pred_check_branch
      %27 = sbr.rel (0) target = $region9
    $region8: #{tpu_custom_call.1} parent=1 // pred_region
      %s29 = ssub.s32 4096, 4096
      %30 = vsyncadd [#allocation9], %s29
      %s31 = sshll.u32 [#allocation8], 4
      %s32 = int_to_ptr.vmem [resolvable:$true] %s31
      %37 = dma.hbm_to_vmem [thread:$0]  %s1, 4096, %s32, [#allocation9], 256, 256, 16
    $region9: #{tpu_custom_call.1} parent=1 // pred_fallthru
      _
    // Predicated region
    $region10: #{tpu_custom_call.1} parent=1 // pred_check
      _
    $region11: #{tpu_custom_call.1} parent=1 // pred_check_branch
      %39 = sbr.rel (0) target = $region13
    $region12: #{tpu_custom_call.1} parent=1 // pred_region
      %s41 = ssub.s32 4096, 4096
      %42 = vsyncadd [#allocation9], %s41
      %s43 = sshll.u32 [#allocation10], 4
      %s44 = int_to_ptr.vmem [resolvable:$true] %s43
      %49 = dma.hbm_to_vmem [thread:$0]  %s2, 4096, %s44, [#allocation9], 128, 128, 8
    $region13: #{tpu_custom_call.1} parent=1 // pred_fallthru
      _
    // Predicated region
    $region14: #{tpu_custom_call.1} parent=1 // pred_check
      _
    $region15: #{tpu_custom_call.1} parent=1 // pred_check_branch
      %51 = sbr.rel (0) target = $region17
    $region16: #{tpu_custom_call.1} parent=1 // pred_region
      %s53 = ssub.s32 4608, 4608
      %54 = vsyncadd [#allocation12], %s53
      %s55 = sshll.u32 [#allocation11], 4
      %s56 = int_to_ptr.vmem [resolvable:$true] %s55
      %61 = dma.hbm_to_vmem [thread:$0]  %s3, 4608, %s56, [#allocation12], 256, 256, 16
    $region17: #{tpu_custom_call.1} parent=1 // pred_fallthru
      _
    // Predicated region
    $region18: #{tpu_custom_call.1} parent=1 // pred_check
      _
    $region19: #{tpu_custom_call.1} parent=1 // pred_check_branch
      %63 = sbr.rel (0) target = $region21
    $region20: #{tpu_custom_call.1} parent=1 // pred_region
      _
    $region21: #{tpu_custom_call.1} parent=1 // pred_fallthru
      _
    // Predicated region
    $region22: #{tpu_custom_call.1} parent=1 // pred_check
      _
    $region23: #{tpu_custom_call.1} parent=1 // pred_check_branch
      %65 = sbr.rel (0) target = $region25
    $region24: #{tpu_custom_call.1} parent=1 // pred_region
      %66 = dma.done [#allocation6], 256
    $region25: #{tpu_custom_call.1} parent=1 // pred_fallthru
      _
    // Predicated region
    $region26: #{tpu_custom_call.1} parent=1 // pred_check
      _
    $region27: #{tpu_custom_call.1} parent=1 // pred_check_branch
      %68 = sbr.rel (0) target = $region29
    $region28: #{tpu_custom_call.1} parent=1 // pred_region
      %69 = dma.done [#allocation9], 4096
    $region29: #{tpu_custom_call.1} parent=1 // pred_fallthru
      _
    // Predicated region
    $region30: #{tpu_custom_call.1} parent=1 // pred_check
      _
    $region31: #{tpu_custom_call.1} parent=1 // pred_check_branch
      %71 = sbr.rel (0) target = $region33
    $region32: #{tpu_custom_call.1} parent=1 // pred_region
      %72 = dma.done [#allocation9], 4096
    $region33: #{tpu_custom_call.1} parent=1 // pred_fallthru
      _
    // Predicated region
    $region34: #{tpu_custom_call.1} parent=1 // pred_check
      _
    $region35: #{tpu_custom_call.1} parent=1 // pred_check_branch
      %74 = sbr.rel (0) target = $region37
    $region36: #{tpu_custom_call.1} parent=1 // pred_region
      %75 = dma.done [#allocation12], 4608
    $region37: #{tpu_custom_call.1} parent=1 // pred_fallthru
      _
    %p76 = scmp.eq.s32.totalorder 0, 0
    // Predicated region
    $region38: #{tpu_custom_call.1} parent=1 // pred_check
      %p77 = pneg %p76
    $region39: #{tpu_custom_call.1} parent=1 // pred_check_branch
      %79 = sbr.rel (%p77) target = $region41
    $region40: #{tpu_custom_call.1} parent=1 // pred_region
      %80 = vst [vmem:[#allocation2] sm:$0xf] 0.0
    $region41: #{tpu_custom_call.1} parent=1 // pred_fallthru
      _
    %v81 = vld [vmem:[#allocation5] sm:$0xff]
    %v82 = vld [vmem:[#allocation5 + $0x8] sm:$0xff]
    %v83 = vld [vmem:[#allocation8] sm:$0xff]
    %v84 = vld [vmem:[#allocation8 + $0x8] sm:$0xff]
    %v85 = vld [vmem:[#allocation8 + $0x10] sm:$0xff]
    %v86 = vld [vmem:[#allocation8 + $0x18] sm:$0xff]
    %v87 = vld [vmem:[#allocation8 + $0x20] sm:$0xff]
    %v88 = vld [vmem:[#allocation8 + $0x28] sm:$0xff]
    %v89 = vld [vmem:[#allocation8 + $0x30] sm:$0xff]
    %v90 = vld [vmem:[#allocation8 + $0x38] sm:$0xff]
    %v91 = vld [vmem:[#allocation8 + $0x40] sm:$0xff]
    %v92 = vld [vmem:[#allocation8 + $0x48] sm:$0xff]
    %v93 = vld [vmem:[#allocation8 + $0x50] sm:$0xff]
    %v94 = vld [vmem:[#allocation8 + $0x58] sm:$0xff]
    %v95 = vld [vmem:[#allocation8 + $0x60] sm:$0xff]
    %v96 = vld [vmem:[#allocation8 + $0x68] sm:$0xff]
    %v97 = vld [vmem:[#allocation8 + $0x70] sm:$0xff]
    %v98 = vld [vmem:[#allocation8 + $0x78] sm:$0xff]
    %v99 = vld [vmem:[#allocation8 + $0x80] sm:$0xff]
    %v100 = vld [vmem:[#allocation8 + $0x88] sm:$0xff]
    %v101 = vld [vmem:[#allocation8 + $0x90] sm:$0xff]
    %v102 = vld [vmem:[#allocation8 + $0x98] sm:$0xff]
    %v103 = vld [vmem:[#allocation8 + $0xa0] sm:$0xff]
    %v104 = vld [vmem:[#allocation8 + $0xa8] sm:$0xff]
    %v105 = vld [vmem:[#allocation8 + $0xb0] sm:$0xff]
    %v106 = vld [vmem:[#allocation8 + $0xb8] sm:$0xff]
    %v107 = vld [vmem:[#allocation8 + $0xc0] sm:$0xff]
    %v108 = vld [vmem:[#allocation8 + $0xc8] sm:$0xff]
    %v109 = vld [vmem:[#allocation8 + $0xd0] sm:$0xff]
    %v110 = vld [vmem:[#allocation8 + $0xd8] sm:$0xff]
    %v111 = vld [vmem:[#allocation8 + $0xe0] sm:$0xff]
    %v112 = vld [vmem:[#allocation8 + $0xe8] sm:$0xff]
    %v113 = vld [vmem:[#allocation8 + $0xf0] sm:$0xff]
    %v114 = vld [vmem:[#allocation8 + $0xf8] sm:$0xff]
    %115 = vmatprep.subr.mxu0 %v114
    %116 = vmatpush1.msra.mxu0 %v113
    %117 = vmatprep.subr.mxu0 %v112
    %118 = vmatpush1.msra.mxu0 %v111
    %119 = vmatprep.subr.mxu0 %v110
    %120 = vmatpush1.msra.mxu0 %v109
    %121 = vmatprep.subr.mxu0 %v108
    %122 = vmatpush1.msra.mxu0 %v107
    %123 = vmatprep.subr.mxu0 %v106
    %124 = vmatpush1.msra.mxu0 %v105
    %125 = vmatprep.subr.mxu0 %v104
    %126 = vmatpush1.msra.mxu0 %v103
    %127 = vmatprep.subr.mxu0 %v102
    %128 = vmatpush1.msra.mxu0 %v101
    %129 = vmatprep.subr.mxu0 %v100
    %130 = vmatpush1.msra.mxu0 %v99
    %131 = vmatprep.subr.mxu0 %v98
    %132 = vmatpush1.msra.mxu0 %v97
    %133 = vmatprep.subr.mxu0 %v96
    %134 = vmatpush1.msra.mxu0 %v95
    %135 = vmatprep.subr.mxu0 %v94
    %136 = vmatpush1.msra.mxu0 %v93
    %137 = vmatprep.subr.mxu0 %v92
    %138 = vmatpush1.msra.mxu0 %v91
    %139 = vmatprep.subr.mxu0 %v90
    %140 = vmatpush1.msra.mxu0 %v89
    %141 = vmatprep.subr.mxu0 %v88
    %142 = vmatpush1.msra.mxu0 %v87
    %143 = vmatprep.subr.mxu0 %v86
    %144 = vmatpush1.msra.mxu0 %v85
    %145 = vmatprep.subr.mxu0 %v84
    %146 = vmatpush1.msra.mxu0 %v83
    %147 = vmatprep.subr.mxu0 0.0
    %148 = vmatpush2.msra.mxu0 0.0
    %149 = vmatprep.subr.mxu0 0.0
    %150 = vmatpush2.msra.mxu0 0.0
    %151 = vmatprep.subr.mxu0 0.0
    %152 = vmatpush2.msra.mxu0 0.0
    %153 = vmatprep.subr.mxu0 0.0
    %154 = vmatpush2.msra.mxu0 0.0
    %155 = vmatprep.subr.mxu0 0.0
    %156 = vmatpush2.msra.mxu0 0.0
    %157 = vmatprep.subr.mxu0 0.0
    %158 = vmatpush2.msra.mxu0 0.0
    %159 = vmatprep.subr.mxu0 0.0
    %160 = vmatpush2.msra.mxu0 0.0
    %161 = vmatprep.subr.mxu0 0.0
    %162 = vmatpush2.msra.mxu0 0.0
    %163 = vmatprep.subr.mxu0 0.0
    %164 = vmatpush2.msra.mxu0 0.0
    %165 = vmatprep.subr.mxu0 0.0
    %166 = vmatpush2.msra.mxu0 0.0
    %167 = vmatprep.subr.mxu0 0.0
    %168 = vmatpush2.msra.mxu0 0.0
    %169 = vmatprep.subr.mxu0 0.0
    %170 = vmatpush2.msra.mxu0 0.0
    %171 = vmatprep.subr.mxu0 0.0
    %172 = vmatpush2.msra.mxu0 0.0
    %173 = vmatprep.subr.mxu0 0.0
    %174 = vmatpush2.msra.mxu0 0.0
    %175 = vmatprep.subr.mxu0 0.0
    %176 = vmatpush2.msra.mxu0 0.0
    %177 = vmatprep.subr.mxu0 0.0
    %178 = vmatpush2.msra.mxu0 0.0
    %179 = vmatprep.mubr.f32.mxu0 0.0
    %180 = vmatmul.mubr.f32.gmra.mxu0 %v81
    %v181 = vpop.f32.mrf.mxu0
    %v182 = vadd.f32 0.0, %v181
    %v183 = vpop.f32.mrf.mxu0
    %v184 = vadd.f32 0.0, %v183
    %185 = vmatprep.mubr.f32.mxu0 0.0
    %186 = vmatmul.mubr.f32.gmra.mxu0 %v82
    %v187 = vpop.f32.mrf.mxu0
    %v188 = vadd.f32 0.0, %v187
    %v189 = vpop.f32.mrf.mxu0
    %v190 = vadd.f32 0.0, %v189
    %191 = vdwg.mxu0
    %192 = vst [vmem:[#allocation3] sm:$0xff] %v182
    %193 = vst [vmem:[#allocation3 + $0x8] sm:$0xff] %v184
    %194 = vst [vmem:[#allocation3 + $0x10] sm:$0xff] %v188
    %195 = vst [vmem:[#allocation3 + $0x18] sm:$0xff] %v190
    %v196 = vld [vmem:[#allocation2] ss:$2 sm:$0x3]
    %s197 = scalar_lea.vmem [#allocation2], 1
    %v198 = vld [vmem:[%s197] ss:$2 sm:$0x3]
    %s199 = smul.u32 0, 2
    %s200 = smul.addr %s199, 8
    %s201 = scalar_lea.vmem [#allocation3], %s200
    %v202 = vld [vmem:[%s201] sm:$0xff]
    %v203 = vld [vmem:[%s201 + $0x8] sm:$0xff]
    %s204 = scalar_lea.vmem [#allocation11], 256
    %v205 = vld [vmem:[%s204] sm:$0xff]
    %v206 = vld [vmem:[%s204 + $0x8] sm:$0xff]
    %v207 = vmul.f32 %v205, %v202
    %v208 = vmul.f32 %v206, %v203
    %s209 = scalar_lea.vmem [#allocation11], 272
    %v210 = vld [vmem:[%s209] sm:$0xff]
    %v211 = vld [vmem:[%s209 + $0x8] sm:$0xff]
    %v212 = vmul.f32 %v210, %v202
    %v213 = vmul.f32 %v211, %v203
    %v216 = vrot.slane %v207, 7
    %v217 = vrot.slane %v208, 7
    %vm220 = vcmask 1040384
    %v221 = vsel %vm220, 0.0, %v216
    %v222 = vsel %vm220, 0.0, %v217
    %v225 = vrot.slane %v212, 7
    %v226 = vrot.slane %v213, 7
    %v229 = vsel %vm220, 0.0, %v225
    %v230 = vsel %vm220, 0.0, %v226
    %v231 = vld [vmem:[#allocation11] sm:$0xff]
    %v232 = vld [vmem:[#allocation11 + $0x8] sm:$0xff]
    %s233 = scalar_lea.vmem [#allocation11], 16
    %v234 = vld [vmem:[%s233] sm:$0xff]
    %v235 = vld [vmem:[%s233 + $0x8] sm:$0xff]
    %s236 = scalar_lea.vmem [#allocation11], 32
    %v237 = vld [vmem:[%s236] sm:$0xff]
    %v238 = vld [vmem:[%s236 + $0x8] sm:$0xff]
    %s239 = scalar_lea.vmem [#allocation11], 48
    %v240 = vld [vmem:[%s239] sm:$0xff]
    %v241 = vld [vmem:[%s239 + $0x8] sm:$0xff]
    %v242 = vmul.f32 %v231, %v221
    %v243 = vmul.f32 %v232, %v222
    %v244 = vmul.f32 %v234, %v229
    %v245 = vmul.f32 %v235, %v230
    %v246 = vadd.f32 %v242, %v244
    %v247 = vadd.f32 %v243, %v245
    %v248 = vadd.f32 %v246, %v207
    %v249 = vadd.f32 %v247, %v208
    %v250 = vmul.f32 %v237, %v221
    %v251 = vmul.f32 %v238, %v222
    %v252 = vmul.f32 %v240, %v229
    %v253 = vmul.f32 %v241, %v230
    %v254 = vadd.f32 %v250, %v252
    %v255 = vadd.f32 %v251, %v253
    %v256 = vadd.f32 %v254, %v212
    %v257 = vadd.f32 %v255, %v213
    %v260 = vrot.slane %v248, 6
    %v261 = vrot.slane %v249, 6
    %vm264 = vcmask 1041408
    %v265 = vsel %vm264, 0.0, %v260
    %v266 = vsel %vm264, 0.0, %v261
    %v269 = vrot.slane %v256, 6
    %v270 = vrot.slane %v257, 6
    %v273 = vsel %vm264, 0.0, %v269
    %v274 = vsel %vm264, 0.0, %v270
    %s275 = scalar_lea.vmem [#allocation11], 64
    %v276 = vld [vmem:[%s275] sm:$0xff]
    %v277 = vld [vmem:[%s275 + $0x8] sm:$0xff]
    %s278 = scalar_lea.vmem [#allocation11], 80
    %v279 = vld [vmem:[%s278] sm:$0xff]
    %v280 = vld [vmem:[%s278 + $0x8] sm:$0xff]
    %s281 = scalar_lea.vmem [#allocation11], 96
    %v282 = vld [vmem:[%s281] sm:$0xff]
    %v283 = vld [vmem:[%s281 + $0x8] sm:$0xff]
    %s284 = scalar_lea.vmem [#allocation11], 112
    %v285 = vld [vmem:[%s284] sm:$0xff]
    %v286 = vld [vmem:[%s284 + $0x8] sm:$0xff]
    %v287 = vmul.f32 %v276, %v265
    %v288 = vmul.f32 %v277, %v266
    %v289 = vmul.f32 %v279, %v273
    %v290 = vmul.f32 %v280, %v274
    %v291 = vadd.f32 %v287, %v289
    %v292 = vadd.f32 %v288, %v290
    %v293 = vadd.f32 %v291, %v248
    %v294 = vadd.f32 %v292, %v249
    %v295 = vmul.f32 %v282, %v265
    %v296 = vmul.f32 %v283, %v266
    %v297 = vmul.f32 %v285, %v273
    %v298 = vmul.f32 %v286, %v274
    %v299 = vadd.f32 %v295, %v297
    %v300 = vadd.f32 %v296, %v298
    %v301 = vadd.f32 %v299, %v256
    %v302 = vadd.f32 %v300, %v257
    %v305 = vrot.slane %v293, 4
    %v306 = vrot.slane %v294, 4
    %vm309 = vcmask 1043456
    %v310 = vsel %vm309, 0.0, %v305
    %v311 = vsel %vm309, 0.0, %v306
    %v314 = vrot.slane %v301, 4
    %v315 = vrot.slane %v302, 4
    %v318 = vsel %vm309, 0.0, %v314
    %v319 = vsel %vm309, 0.0, %v315
    %s320 = scalar_lea.vmem [#allocation11], 128
    %v321 = vld [vmem:[%s320] sm:$0xff]
    %v322 = vld [vmem:[%s320 + $0x8] sm:$0xff]
    %s323 = scalar_lea.vmem [#allocation11], 144
    %v324 = vld [vmem:[%s323] sm:$0xff]
    %v325 = vld [vmem:[%s323 + $0x8] sm:$0xff]
    %s326 = scalar_lea.vmem [#allocation11], 160
    %v327 = vld [vmem:[%s326] sm:$0xff]
    %v328 = vld [vmem:[%s326 + $0x8] sm:$0xff]
    %s329 = scalar_lea.vmem [#allocation11], 176
    %v330 = vld [vmem:[%s329] sm:$0xff]
    %v331 = vld [vmem:[%s329 + $0x8] sm:$0xff]
    %v332 = vmul.f32 %v321, %v310
    %v333 = vmul.f32 %v322, %v311
    %v334 = vmul.f32 %v324, %v318
    %v335 = vmul.f32 %v325, %v319
    %v336 = vadd.f32 %v332, %v334
    %v337 = vadd.f32 %v333, %v335
    %v338 = vadd.f32 %v336, %v293
    %v339 = vadd.f32 %v337, %v294
    %v340 = vmul.f32 %v327, %v310
    %v341 = vmul.f32 %v328, %v311
    %v342 = vmul.f32 %v330, %v318
    %v343 = vmul.f32 %v331, %v319
    %v344 = vadd.f32 %v340, %v342
    %v345 = vadd.f32 %v341, %v343
    %v346 = vadd.f32 %v344, %v301
    %v347 = vadd.f32 %v345, %v302
    %s348 = scalar_lea.vmem [#allocation11], 192
    %v349 = vld [vmem:[%s348] sm:$0xff]
    %v350 = vld [vmem:[%s348 + $0x8] sm:$0xff]
    %v352 = vlaneseq
    %v353 = vshrl.u32 %v352, 7
    %v354 = vsub.s32 0, %v353
    %v355 = vrot.slane %v196, %v354
    %v356 = vlaneseq
    %v357 = vshrl.u32 %v356, 7
    %v358 = vsub.s32 1, %v357
    %v359 = vrot.slane %v196, %v358
    %v362 = vmul.f32 %v349, %v355
    %v363 = vmul.f32 %v350, %v359
    %s364 = scalar_lea.vmem [#allocation11], 208
    %v365 = vld [vmem:[%s364] sm:$0xff]
    %v366 = vld [vmem:[%s364 + $0x8] sm:$0xff]
    %v368 = vlaneseq
    %v369 = vshrl.u32 %v368, 7
    %v370 = vsub.s32 0, %v369
    %v371 = vrot.slane %v198, %v370
    %v372 = vlaneseq
    %v373 = vshrl.u32 %v372, 7
    %v374 = vsub.s32 1, %v373
    %v375 = vrot.slane %v198, %v374
    %v378 = vmul.f32 %v365, %v371
    %v379 = vmul.f32 %v366, %v375
    %v380 = vadd.f32 %v362, %v378
    %v381 = vadd.f32 %v363, %v379
    %v382 = vadd.f32 %v380, %v338
    %v383 = vadd.f32 %v381, %v339
    %s384 = scalar_lea.vmem [#allocation11], 224
    %v385 = vld [vmem:[%s384] sm:$0xff]
    %v386 = vld [vmem:[%s384 + $0x8] sm:$0xff]
    %v387 = vmul.f32 %v385, %v355
    %v388 = vmul.f32 %v386, %v359
    %s389 = scalar_lea.vmem [#allocation11], 240
    %v390 = vld [vmem:[%s389] sm:$0xff]
    %v391 = vld [vmem:[%s389 + $0x8] sm:$0xff]
    %v392 = vmul.f32 %v390, %v371
    %v393 = vmul.f32 %v391, %v375
    %v394 = vadd.f32 %v387, %v392
    %v395 = vadd.f32 %v388, %v393
    %v396 = vadd.f32 %v394, %v346
    %v397 = vadd.f32 %v395, %v347
    %s398 = smul.addr %s199, 8
    %s399 = scalar_lea.vmem [#allocation4], %s398
    %400 = vst [vmem:[%s399] sm:$0xff] %v396
    %401 = vst [vmem:[%s399 + $0x8] sm:$0xff] %v397
    %s402 = smul.u32 1, 2
    %s403 = smul.addr %s402, 8
    %s404 = scalar_lea.vmem [#allocation3], %s403
    %v405 = vld [vmem:[%s404] sm:$0xff]
    %v406 = vld [vmem:[%s404 + $0x8] sm:$0xff]
    %v407 = vld [vmem:[%s204] sm:$0xff]
    %v408 = vld [vmem:[%s204 + $0x8] sm:$0xff]
    %v409 = vmul.f32 %v407, %v405
    %v410 = vmul.f32 %v408, %v406
    %v411 = vld [vmem:[%s209] sm:$0xff]
    %v412 = vld [vmem:[%s209 + $0x8] sm:$0xff]
    %v413 = vmul.f32 %v411, %v405
    %v414 = vmul.f32 %v412, %v406
    %v417 = vrot.slane %v409, 7
    %v418 = vrot.slane %v410, 7
    %v421 = vsel %vm220, 0.0, %v417
    %v422 = vsel %vm220, 0.0, %v418
    %v425 = vrot.slane %v413, 7
    %v426 = vrot.slane %v414, 7
    %v429 = vsel %vm220, 0.0, %v425
    %v430 = vsel %vm220, 0.0, %v426
    %v431 = vld [vmem:[#allocation11] sm:$0xff]
    %v432 = vld [vmem:[#allocation11 + $0x8] sm:$0xff]
    %v433 = vld [vmem:[%s233] sm:$0xff]
    %v434 = vld [vmem:[%s233 + $0x8] sm:$0xff]
    %v435 = vld [vmem:[%s236] sm:$0xff]
    %v436 = vld [vmem:[%s236 + $0x8] sm:$0xff]
    %v437 = vld [vmem:[%s239] sm:$0xff]
    %v438 = vld [vmem:[%s239 + $0x8] sm:$0xff]
    %v439 = vmul.f32 %v431, %v421
    %v440 = vmul.f32 %v432, %v422
    %v441 = vmul.f32 %v433, %v429
    %v442 = vmul.f32 %v434, %v430
    %v443 = vadd.f32 %v439, %v441
    %v444 = vadd.f32 %v440, %v442
    %v445 = vadd.f32 %v443, %v409
    %v446 = vadd.f32 %v444, %v410
    %v447 = vmul.f32 %v435, %v421
    %v448 = vmul.f32 %v436, %v422
    %v449 = vmul.f32 %v437, %v429
    %v450 = vmul.f32 %v438, %v430
    %v451 = vadd.f32 %v447, %v449
    %v452 = vadd.f32 %v448, %v450
    %v453 = vadd.f32 %v451, %v413
    %v454 = vadd.f32 %v452, %v414
    %v457 = vrot.slane %v445, 6
    %v458 = vrot.slane %v446, 6
    %v461 = vsel %vm264, 0.0, %v457
    %v462 = vsel %vm264, 0.0, %v458
    %v465 = vrot.slane %v453, 6
    %v466 = vrot.slane %v454, 6
    %v469 = vsel %vm264, 0.0, %v465
    %v470 = vsel %vm264, 0.0, %v466
    %v471 = vld [vmem:[%s275] sm:$0xff]
    %v472 = vld [vmem:[%s275 + $0x8] sm:$0xff]
    %v473 = vld [vmem:[%s278] sm:$0xff]
    %v474 = vld [vmem:[%s278 + $0x8] sm:$0xff]
    %v475 = vld [vmem:[%s281] sm:$0xff]
    %v476 = vld [vmem:[%s281 + $0x8] sm:$0xff]
    %v477 = vld [vmem:[%s284] sm:$0xff]
    %v478 = vld [vmem:[%s284 + $0x8] sm:$0xff]
    %v479 = vmul.f32 %v471, %v461
    %v480 = vmul.f32 %v472, %v462
    %v481 = vmul.f32 %v473, %v469
    %v482 = vmul.f32 %v474, %v470
    %v483 = vadd.f32 %v479, %v481
    %v484 = vadd.f32 %v480, %v482
    %v485 = vadd.f32 %v483, %v445
    %v486 = vadd.f32 %v484, %v446
    %v487 = vmul.f32 %v475, %v461
    %v488 = vmul.f32 %v476, %v462
    %v489 = vmul.f32 %v477, %v469
    %v490 = vmul.f32 %v478, %v470
    %v491 = vadd.f32 %v487, %v489
    %v492 = vadd.f32 %v488, %v490
    %v493 = vadd.f32 %v491, %v453
    %v494 = vadd.f32 %v492, %v454
    %v497 = vrot.slane %v485, 4
    %v498 = vrot.slane %v486, 4
    %v501 = vsel %vm309, 0.0, %v497
    %v502 = vsel %vm309, 0.0, %v498
    %v505 = vrot.slane %v493, 4
    %v506 = vrot.slane %v494, 4
    %v509 = vsel %vm309, 0.0, %v505
    %v510 = vsel %vm309, 0.0, %v506
    %v511 = vld [vmem:[%s320] sm:$0xff]
    %v512 = vld [vmem:[%s320 + $0x8] sm:$0xff]
    %v513 = vld [vmem:[%s323] sm:$0xff]
    %v514 = vld [vmem:[%s323 + $0x8] sm:$0xff]
    %v515 = vld [vmem:[%s326] sm:$0xff]
    %v516 = vld [vmem:[%s326 + $0x8] sm:$0xff]
    %v517 = vld [vmem:[%s329] sm:$0xff]
    %v518 = vld [vmem:[%s329 + $0x8] sm:$0xff]
    %v519 = vmul.f32 %v511, %v501
    %v520 = vmul.f32 %v512, %v502
    %v521 = vmul.f32 %v513, %v509
    %v522 = vmul.f32 %v514, %v510
    %v523 = vadd.f32 %v519, %v521
    %v524 = vadd.f32 %v520, %v522
    %v525 = vadd.f32 %v523, %v485
    %v526 = vadd.f32 %v524, %v486
    %v527 = vmul.f32 %v515, %v501
    %v528 = vmul.f32 %v516, %v502
    %v529 = vmul.f32 %v517, %v509
    %v530 = vmul.f32 %v518, %v510
    %v531 = vadd.f32 %v527, %v529
    %v532 = vadd.f32 %v528, %v530
    %v533 = vadd.f32 %v531, %v493
    %v534 = vadd.f32 %v532, %v494
    %v535 = vld [vmem:[%s348] sm:$0xff]
    %v536 = vld [vmem:[%s348 + $0x8] sm:$0xff]
    %v537 = vlaneseq
    %v538 = vshrl.u32 %v537, 7
    %v539 = vsub.s32 7, %v538
    %v540 = vrot.slane %v382, %v539
    %v541 = vlaneseq
    %v542 = vshrl.u32 %v541, 7
    %v543 = vsub.s32 7, %v542
    %v544 = vrot.slane %v383, %v543
    %v545 = vmul.f32 %v535, %v540
    %v546 = vmul.f32 %v536, %v544
    %v547 = vld [vmem:[%s364] sm:$0xff]
    %v548 = vld [vmem:[%s364 + $0x8] sm:$0xff]
    %v549 = vlaneseq
    %v550 = vshrl.u32 %v549, 7
    %v551 = vsub.s32 7, %v550
    %v552 = vrot.slane %v396, %v551
    %v553 = vlaneseq
    %v554 = vshrl.u32 %v553, 7
    %v555 = vsub.s32 7, %v554
    %v556 = vrot.slane %v397, %v555
    %v557 = vmul.f32 %v547, %v552
    %v558 = vmul.f32 %v548, %v556
    %v559 = vadd.f32 %v545, %v557
    %v560 = vadd.f32 %v546, %v558
    %v561 = vadd.f32 %v559, %v525
    %v562 = vadd.f32 %v560, %v526
    %v563 = vld [vmem:[%s384] sm:$0xff]
    %v564 = vld [vmem:[%s384 + $0x8] sm:$0xff]
    %v565 = vmul.f32 %v563, %v540
    %v566 = vmul.f32 %v564, %v544
    %v567 = vld [vmem:[%s389] sm:$0xff]
    %v568 = vld [vmem:[%s389 + $0x8] sm:$0xff]
    %v569 = vmul.f32 %v567, %v552
    %v570 = vmul.f32 %v568, %v556
    %v571 = vadd.f32 %v565, %v569
    %v572 = vadd.f32 %v566, %v570
    %v573 = vadd.f32 %v571, %v533
    %v574 = vadd.f32 %v572, %v534
    %s575 = smul.addr %s402, 8
    %s576 = scalar_lea.vmem [#allocation4], %s575
    %577 = vst [vmem:[%s576] sm:$0xff] %v573
    %578 = vst [vmem:[%s576 + $0x8] sm:$0xff] %v574
    %v581 = vcombine.high %v561, %v562
    %v583 = vunpack.c.l.s4 1966171168
    %v584 = vunpack.c.0.s8 %v583
    %v585 = vlaneseq
    %v586 = vshrl.u32 %v585, 7
    %v587 = vsub.s32 %v584, %v586
    %v588 = vrot.slane %v581, %v587
    %v589 = vcombine.high %v588, %v588
    %v591 = vunpack.c.l.s4 1966171168
    %v592 = vunpack.c.0.s8 %v591
    %v593 = vlaneseq
    %v594 = vshrl.u32 %v593, 7
    %v595 = vsub.s32 %v592, %v594
    %v596 = vrot.slane %v589, %v595
    %v597 = vcombine.high %v596, %v596
    %v599 = vlaneseq
    %vm600 = vcmp.ge.s32.totalorder %v599, 0
    %vm601 = vcmp.lt.s32.totalorder %v599, 256
    %vm602 = vmand %vm600, %vm601
    %603 = vst.msk [vmem:[#allocation2] ss:$2 sm:$0x3] %vm602, %v597
    %v606 = vcombine.high %v573, %v574
    %v608 = vunpack.c.l.s4 1966171168
    %v609 = vunpack.c.0.s8 %v608
    %v610 = vlaneseq
    %v611 = vshrl.u32 %v610, 7
    %v612 = vsub.s32 %v609, %v611
    %v613 = vrot.slane %v606, %v612
    %v614 = vcombine.high %v613, %v613
    %v616 = vunpack.c.l.s4 1966171168
    %v617 = vunpack.c.0.s8 %v616
    %v618 = vlaneseq
    %v619 = vshrl.u32 %v618, 7
    %v620 = vsub.s32 %v617, %v619
    %v621 = vrot.slane %v614, %v620
    %v622 = vcombine.high %v621, %v621
    %624 = vst.msk [vmem:[%s197] ss:$2 sm:$0x3] %vm602, %v622
    %v625 = vld [vmem:[#allocation4] sm:$0xff]
    %v626 = vld [vmem:[#allocation4 + $0x8] sm:$0xff]
    %v627 = vld [vmem:[#allocation4 + $0x10] sm:$0xff]
    %v628 = vld [vmem:[#allocation4 + $0x18] sm:$0xff]
    %v629 = vld [vmem:[#allocation10] sm:$0xff]
    %v630 = vld [vmem:[#allocation10 + $0x8] sm:$0xff]
    %v631 = vld [vmem:[#allocation10 + $0x10] sm:$0xff]
    %v632 = vld [vmem:[#allocation10 + $0x18] sm:$0xff]
    %v633 = vld [vmem:[#allocation10 + $0x20] sm:$0xff]
    %v634 = vld [vmem:[#allocation10 + $0x28] sm:$0xff]
    %v635 = vld [vmem:[#allocation10 + $0x30] sm:$0xff]
    %v636 = vld [vmem:[#allocation10 + $0x38] sm:$0xff]
    %v637 = vld [vmem:[#allocation10 + $0x40] sm:$0xff]
    %v638 = vld [vmem:[#allocation10 + $0x48] sm:$0xff]
    %v639 = vld [vmem:[#allocation10 + $0x50] sm:$0xff]
    %v640 = vld [vmem:[#allocation10 + $0x58] sm:$0xff]
    %v641 = vld [vmem:[#allocation10 + $0x60] sm:$0xff]
    %v642 = vld [vmem:[#allocation10 + $0x68] sm:$0xff]
    %v643 = vld [vmem:[#allocation10 + $0x70] sm:$0xff]
    %v644 = vld [vmem:[#allocation10 + $0x78] sm:$0xff]
    %v645 = vld [vmem:[#allocation10 + $0x80] sm:$0xff]
    %v646 = vld [vmem:[#allocation10 + $0x88] sm:$0xff]
    %v647 = vld [vmem:[#allocation10 + $0x90] sm:$0xff]
    %v648 = vld [vmem:[#allocation10 + $0x98] sm:$0xff]
    %v649 = vld [vmem:[#allocation10 + $0xa0] sm:$0xff]
    %v650 = vld [vmem:[#allocation10 + $0xa8] sm:$0xff]
    %v651 = vld [vmem:[#allocation10 + $0xb0] sm:$0xff]
    %v652 = vld [vmem:[#allocation10 + $0xb8] sm:$0xff]
    %v653 = vld [vmem:[#allocation10 + $0xc0] sm:$0xff]
    %v654 = vld [vmem:[#allocation10 + $0xc8] sm:$0xff]
    %v655 = vld [vmem:[#allocation10 + $0xd0] sm:$0xff]
    %v656 = vld [vmem:[#allocation10 + $0xd8] sm:$0xff]
    %v657 = vld [vmem:[#allocation10 + $0xe0] sm:$0xff]
    %v658 = vld [vmem:[#allocation10 + $0xe8] sm:$0xff]
    %v659 = vld [vmem:[#allocation10 + $0xf0] sm:$0xff]
    %v660 = vld [vmem:[#allocation10 + $0xf8] sm:$0xff]
    %v661 = vld [vmem:[#allocation5] sm:$0xff]
    %v662 = vld [vmem:[#allocation5 + $0x8] sm:$0xff]
    %v663 = vld [vmem:[%s4] sm:$0x1]
    %v665 = vlaneseq
    %v666 = vshrl.u32 %v665, 7
    %v667 = vsub.s32 0, %v666
    %v668 = vrot.slane %v663, %v667
    %v670 = vmul.f32 %v661, %v668
    %v671 = vmul.f32 %v662, %v668
    %672 = vmatprep.subr.mxu0 0.0
    %673 = vmatpush1.msra.mxu0 %v644
    %674 = vmatprep.subr.mxu0 0.0
    %675 = vmatpush1.msra.mxu0 %v643
    %676 = vmatprep.subr.mxu0 0.0
    %677 = vmatpush1.msra.mxu0 %v642
    %678 = vmatprep.subr.mxu0 0.0
    %679 = vmatpush1.msra.mxu0 %v641
    %680 = vmatprep.subr.mxu0 0.0
    %681 = vmatpush1.msra.mxu0 %v640
    %682 = vmatprep.subr.mxu0 0.0
    %683 = vmatpush1.msra.mxu0 %v639
    %684 = vmatprep.subr.mxu0 0.0
    %685 = vmatpush1.msra.mxu0 %v638
    %686 = vmatprep.subr.mxu0 0.0
    %687 = vmatpush1.msra.mxu0 %v637
    %688 = vmatprep.subr.mxu0 0.0
    %689 = vmatpush1.msra.mxu0 %v636
    %690 = vmatprep.subr.mxu0 0.0
    %691 = vmatpush1.msra.mxu0 %v635
    %692 = vmatprep.subr.mxu0 0.0
    %693 = vmatpush1.msra.mxu0 %v634
    %694 = vmatprep.subr.mxu0 0.0
    %695 = vmatpush1.msra.mxu0 %v633
    %696 = vmatprep.subr.mxu0 0.0
    %697 = vmatpush1.msra.mxu0 %v632
    %698 = vmatprep.subr.mxu0 0.0
    %699 = vmatpush1.msra.mxu0 %v631
    %700 = vmatprep.subr.mxu0 0.0
    %701 = vmatpush1.msra.mxu0 %v630
    %702 = vmatprep.subr.mxu0 0.0
    %703 = vmatpush1.msra.mxu0 %v629
    %704 = vmatprep.subr.mxu0 0.0
    %705 = vmatpush2.msra.mxu0 %v660
    %706 = vmatprep.subr.mxu0 0.0
    %707 = vmatpush2.msra.mxu0 %v659
    %708 = vmatprep.subr.mxu0 0.0
    %709 = vmatpush2.msra.mxu0 %v658
    %710 = vmatprep.subr.mxu0 0.0
    %711 = vmatpush2.msra.mxu0 %v657
    %712 = vmatprep.subr.mxu0 0.0
    %713 = vmatpush2.msra.mxu0 %v656
    %714 = vmatprep.subr.mxu0 0.0
    %715 = vmatpush2.msra.mxu0 %v655
    %716 = vmatprep.subr.mxu0 0.0
    %717 = vmatpush2.msra.mxu0 %v654
    %718 = vmatprep.subr.mxu0 0.0
    %719 = vmatpush2.msra.mxu0 %v653
    %720 = vmatprep.subr.mxu0 0.0
    %721 = vmatpush2.msra.mxu0 %v652
    %722 = vmatprep.subr.mxu0 0.0
    %723 = vmatpush2.msra.mxu0 %v651
    %724 = vmatprep.subr.mxu0 0.0
    %725 = vmatpush2.msra.mxu0 %v650
    %726 = vmatprep.subr.mxu0 0.0
    %727 = vmatpush2.msra.mxu0 %v649
    %728 = vmatprep.subr.mxu0 0.0
    %729 = vmatpush2.msra.mxu0 %v648
    %730 = vmatprep.subr.mxu0 0.0
    %731 = vmatpush2.msra.mxu0 %v647
    %732 = vmatprep.subr.mxu0 0.0
    %733 = vmatpush2.msra.mxu0 %v646
    %734 = vmatprep.subr.mxu0 0.0
    %735 = vmatpush2.msra.mxu0 %v645
    %736 = vmatprep.mubr.f32.mxu0 %v626
    %737 = vmatmul.mubr.f32.gmra.mxu0 %v625
    %v738 = vpop.f32.mrf.mxu0
    %v739 = vadd.f32 %v670, %v738
    %v740 = vpop.f32.mrf.mxu0
    %741 = vmatprep.mubr.f32.mxu0 %v628
    %742 = vmatmul.mubr.f32.gmra.mxu0 %v627
    %v743 = vpop.f32.mrf.mxu0
    %v744 = vadd.f32 %v671, %v743
    %v745 = vpop.f32.mrf.mxu0
    %746 = vdwg.mxu0
    %747 = vst [vmem:[#allocation13] sm:$0xff] %v739
    %748 = vst [vmem:[#allocation13 + $0x8] sm:$0xff] %v744
    // Predicated region
    $region42: #{tpu_custom_call.1} parent=1 // pred_check
      _
    $region43: #{tpu_custom_call.1} parent=1 // pred_check_branch
      %750 = sbr.rel (0) target = $region45
    $region44: #{tpu_custom_call.1} parent=1 // pred_region
      %s752 = ssub.s32 256, 256
      %753 = vsyncadd [#allocation7], %s752
      %s754 = sshll.u32 [#allocation13], 4
      %s755 = int_to_ptr.vmem [resolvable:$true] %s754
      %760 = dma.vmem_to_hbm [thread:$0]  %s755, 256, %s5, [#allocation7], 128, 128, 8
    $region45: #{tpu_custom_call.1} parent=1 // pred_fallthru
      _
    // Predicated region
    $region46: #{tpu_custom_call.1} parent=1 // pred_check
      _
    $region47: #{tpu_custom_call.1} parent=1 // pred_check_branch
      %762 = sbr.rel (0) target = $region49
    $region48: #{tpu_custom_call.1} parent=1 // pred_region
      %763 = dma.done [#allocation7], 256
    $region49: #{tpu_custom_call.1} parent=1 // pred_fallthru
      _
    %764 = vsyncpa [#allocation6], 1
    %765 = vsyncpa [#allocation9], 1
    %766 = vsyncpa [#allocation12], 1
    %767 = vsyncpa [#allocation7], 1

</llo_original>
